<compile_context>
chip_gen: v6e
topology: v6e:2x2x1
jax: 0.10.0
libtpu: 0.0.40
codegen_flags: <defaults>
</compile_context>

<pallas_src>
import jax
import jax.numpy as jnp
from jax.experimental import pallas as pl
from jax.experimental.pallas import tpu as pltpu

_LANE = 128
_SUBLANE = 8
# ~1 MiB blocks: the measured HBM-roofline plateau (~85%) is reached well below
# this, per-step overhead (~0.35 us) is fully hidden, and 2 (in+out) x 2
# (double-buffer) x ~1 MiB = ~4 MiB of VMEM leaves large headroom under the
# scoped defaults on v5e/v6e/v7x.
_TARGET_BLOCK_BYTES = 1 << 20
# Guarantee a multi-step grid so reads/writes pipeline and (on v7x) both
# TensorCores get work.
_MIN_GRID_STEPS = 8
# Portable semantics: all copy blocks are independent.  On v7x one could use
# pltpu.CORE_PARALLEL on the leading axis to make the 2-TC split explicit;
# "parallel" is the safe choice on v5e/v6e and still allows grid sharding.
_DIM_SEMANTICS = ("parallel", "parallel", "parallel")


def _round_up(v: int, m: int) -> int:
    return ((v + m - 1) // m) * m


def _identity_kernel(x_ref, o_ref):
    # forward(x) = x : dtype-preserving copy of the current tile.
    o_ref[...] = x_ref[...]


def _copy_3d(y: jax.Array) -> jax.Array:
    """Streaming copy of a (G, R, C) view.

    Blocks target ~1 MiB; the last two (layout-carrying) dims are either full
    extent or tiled in (8k, 128m) multiples, with ragged edges masked by the
    cdiv grid — so the input is consumed in its native layout (no relayout,
    no padding) and HBM traffic stays at 2N bytes.
    """
    G, R, C = y.shape
    itemsize = jnp.dtype(y.dtype).itemsize

    # ---- lane (last) dim -----------------------------------------------------
    sub = min(R, _SUBLANE)  # sublanes one row-strip actually occupies
    if sub * C * itemsize <= _TARGET_BLOCK_BYTES:
        tile_c = C                                  # full extent: always legal
    else:
        tile_c = max(
            _LANE,
            (_TARGET_BLOCK_BYTES // (sub * itemsize)) // _LANE * _LANE,
        )                                           # 128-multiple: legal, masked
    c_steps = pl.cdiv(C, tile_c)

    # ---- sublane (second-to-last) dim ----------------------------------------
    cap_r = max(
        _SUBLANE,
        (_TARGET_BLOCK_BYTES // max(1, tile_c * itemsize)) // _SUBLANE * _SUBLANE,
    )
    tile_r = R if cap_r >= R else cap_r             # full extent or 8-multiple
    # If the leading/lane axes alone cannot provide enough grid steps, carve the
    # row axis into 8-row multiples to restore pipelined DMA overlap.
    if G * c_steps < _MIN_GRID_STEPS and R > _SUBLANE:
        want_r_steps = pl.cdiv(_MIN_GRID_STEPS, G * c_steps)
        tile_r = min(
            tile_r,
            max(_SUBLANE, _round_up(pl.cdiv(R, want_r_steps), _SUBLANE)),
        )
    r_steps = pl.cdiv(R, tile_r)

    # ---- leading (collapsed batch) dim ----------------------------------------
    if tile_r == R and tile_c == C:
        # Whole (R, C) slabs are small: pack several per block, but keep enough
        # grid steps for pipelining / cross-TC splitting.
        slab_bytes = max(1, R * C * itemsize)
        cap_g = max(1, _TARGET_BLOCK_BYTES // slab_bytes)
        tile_g = max(1, min(cap_g, pl.cdiv(G, _MIN_GRID_STEPS), G))
    else:
        tile_g = 1                                   # keep per-block DMAs contiguous

    block = (tile_g, tile_r, tile_c)
    grid = (pl.cdiv(G, tile_g), r_steps, c_steps)

    return pl.pallas_call(
        _identity_kernel,
        out_shape=jax.ShapeDtypeStruct(y.shape, y.dtype),
        grid=grid,
        in_specs=[pl.BlockSpec(block, lambda g, r, c: (g, r, c))],
        out_specs=pl.BlockSpec(block, lambda g, r, c: (g, r, c)),
        compiler_params=pltpu.CompilerParams(
            dimension_semantics=_DIM_SEMANTICS,
        ),
    )(y)
    # TODO(synk): an HBM->HBM pltpu.make_async_copy loop (memory_space=pl.ANY)
    # would skip the VMEM round trip entirely; BlockSpec staging is kept since
    # HBM bandwidth is the binding resource either way.


def identity(x: jax.Array, *, donate: bool = False) -> jax.Array:
    """Identity forward pass.

    donate=True returns the input aliased (exactly PyTorch's `return x`
    semantics) and skips the redundant 2N-byte HBM copy; otherwise a fresh,
    value- and dtype-identical array is produced by the Pallas kernel.
    """
    if donate or x.size == 0:
        return x

    if x.ndim >= 2:
        # Collapse ONLY the leading dims; the trailing two dims, which carry
        # the (8,128) tiled layout, are untouched, so this reshape is free and
        # no relayout copy is inserted before the pallas_call.
        lead = 1
        for d in x.shape[:-2]:
            lead *= d
        y = x.reshape(lead, x.shape[-2], x.shape[-1])
    else:
        # 0-D / 1-D: view as a single-row slab (metadata-only for a vector).
        y = x.reshape(1, 1, -1)

    return _copy_3d(y).reshape(x.shape)


if __name__ == "__main__":
    key = jax.random.PRNGKey(0)

    # Small NCHW feature map consistent with the vision model this module comes
    # from; trailing dims are NOT lane-aligned, exercising the native-shape
    # (no relayout, full-extent last-two-dims block) path with an 8-step grid.
    x = jax.random.normal(key, (2, 4, 16, 16), dtype=jnp.float32)
    y = jax.block_until_ready(identity(x))
    assert y.shape == x.shape
    assert y.dtype == x.dtype
    assert bool(jnp.array_equal(y, x))

    # Lane-aligned path (last dim a multiple of 128), different dtype.
    x2 = jax.random.normal(jax.random.PRNGKey(0), (8, 32, 128), dtype=jnp.bfloat16)
    y2 = jax.block_until_ready(identity(x2))
    assert y2.shape == x2.shape and y2.dtype == x2.dtype
    assert bool(jnp.array_equal(y2, x2))

    # Donated path: no kernel at all, aliased return (PyTorch Identity semantics).
    assert identity(x, donate=True) is x

    print("KERNEL_OK")
</pallas_src>

<mosaic_0001>
module attributes {stable_mosaic.version = 11 : i64} {
  func.func @_identity_kernel(%arg0: i32, %arg1: i32, %arg2: i32, %arg3: memref<1x16x16xf32, #tpu.memory_space<vmem>>, %arg4: memref<1x16x16xf32, #tpu.memory_space<vmem>>) attributes {dimension_semantics = [#tpu.dimension_semantics<parallel>, #tpu.dimension_semantics<parallel>, #tpu.dimension_semantics<parallel>], iteration_bounds = array<i64: 8, 1, 1>, scalar_prefetch = 0 : i64, scratch_operands = 0 : i64, tpu.core_type = #tpu.core_type<tc>, window_params = [{transform_indices = @transform_0, window_bounds = array<i64: 1, 16, 16>}, {transform_indices = @transform_1, window_bounds = array<i64: 1, 16, 16>}]} {
    %c0 = arith.constant 0 : index
    %c0_0 = arith.constant 0 : index
    %c0_1 = arith.constant 0 : index
    %0 = vector.load %arg3[%c0, %c0_0, %c0_1] : memref<1x16x16xf32, #tpu.memory_space<vmem>>, vector<1x16x16xf32>
    %c0_2 = arith.constant 0 : index
    %c0_3 = arith.constant 0 : index
    %c0_4 = arith.constant 0 : index
    %1 = vector.load %arg4[%c0_2, %c0_3, %c0_4] : memref<1x16x16xf32, #tpu.memory_space<vmem>>, vector<1x16x16xf32>
    tpu.vector_store %arg4[%c0_2, %c0_3, %c0_4], %0 {strides = array<i32>} : memref<1x16x16xf32, #tpu.memory_space<vmem>>, vector<1x16x16xf32>,
    return
  }
  func.func @transform_0(%arg0: i32, %arg1: i32, %arg2: i32) -> (i32, i32, i32) {
    %c0_i32 = arith.constant 0 : i32
    return %arg0, %arg1, %arg2 : i32, i32, i32
  }
  func.func @transform_1(%arg0: i32, %arg1: i32, %arg2: i32) -> (i32, i32, i32) {
    %c0_i32 = arith.constant 0 : i32
    return %arg0, %arg1, %arg2 : i32, i32, i32
  }
}

</mosaic_0001>

<llo_original>
// kernel: tpu_custom_call.1
$region0: #{tpu_custom_call.1}
  #allocation0 [shape = 'u32[]', space=smem, size = 0x4, offset = 0x4, fixed_abs, tag = 'smem constant byte address 0x4 - core index']
  #allocation1 [shape = 'u32[144,128]{1,0:T(1,128)}', space=vmem, size = 0x12000, scoped, tag = 'internal scratch']
  %s0 = inlined_call_operand.hbm [shape: f32[8,16,16], index: 0, kind: input, shape index: {}]
  %s1 = inlined_call_operand.hbm [shape: f32[8,16,16], index: 1, kind: output, shape index: {}]
  %s2 = sld [smem:[#allocation0]]
  $region41: #{tpu_custom_call.1} parent=0
    _
  %s4 = ssub.s32 1, %s2
  %s5 = scalar_select 0, %s4, %s2
  $region1: #{tpu_custom_call.1} parent=0
    #allocation2 [shape = 'u8[16384]{0}', space=vmem, size = 0x4000, scoped, tag = 'input window, operand 0']
    #allocation3 [shape = 's32[2]{0}', space=sflag, size = 0x8, scoped, tag = 'scoped memory for tpu_custom_call.1']
    #allocation4 [shape = 's32[2]{0}', space=sflag, size = 0x8, scoped, tag = 'scoped memory for tpu_custom_call.1']
    #allocation5 [shape = 'u8[16384]{0}', space=vmem, size = 0x4000, scoped, tag = 'output window, operand 0']
    %6 = vsyncpa [#allocation3], 0
    %s7 = scalar_lea.sflag [#allocation3], 1
    %8 = vsyncpa %s7, 0
    %9 = vsyncpa [#allocation4], 0
    %s10 = scalar_lea.sflag [#allocation4], 1
    %11 = vsyncpa %s10, 0
    loop: start=0, step=1, limit=10
    $region2: #{tpu_custom_call.1} parent=1 // loop_pre_header
      _
    $region3: #{tpu_custom_call.1} parent=1 // loop_header
      %s13 = sphi 0, %s17
      %p14 = scmp.ge.s32.totalorder %s13, 10
      %s20 = sphi 0, %s39
      %s21 = sphi 0, %s35
      %s22 = sphi 0, %s31
      %s23 = sphi 0, %s20
      %s24 = sphi 0, %s21
      %s25 = sphi 0, %s22
      %s26 = sphi 0, %s23
      %s27 = sphi 0, %s24
      %s28 = sphi 0, %s25
      %s46 = sphi 0, %s48
      %s49 = sphi 0, %s46
      %s50 = sphi 0, %s49
      %s66 = sphi 0, %s50
      %s76 = sphi 0, %s78
      %s79 = sphi 0, %s76
      %s80 = sphi 0, %s79
      %s96 = sphi 0, %s80
    $region4: #{tpu_custom_call.1} parent=1 // loop_header_branch
      %16 = sbr.rel (%p14) target = $region8
    $region5: #{tpu_custom_call.1} parent=1 // loop_body
      %s18 = ssub.s32 %s13, 1
      %s19 = ssub.s32 %s13, 2
      %s29 = sadd.s32 1, %s22
      %p30 = scmp.ge.s32.totalorder %s29, 1
      %s31 = scalar_select %p30, 0, %s29
      %s32 = sadd.s32 1, %s21
      %s33 = scalar_select %p30, %s32, %s21
      %p34 = scmp.ge.s32.totalorder %s33, 1
      %s35 = scalar_select %p34, 0, %s33
      %s36 = sadd.s32 1, %s20
      %s37 = scalar_select %p34, %s36, %s20
      %p38 = scmp.ge.s32.totalorder %s37, 8
      %s39 = scalar_select %p38, 0, %s37
      %s40 = ssub.s32 %s20, %s39
      %s41 = ssub.s32 %s21, %s35
      %s42 = sor.u32 %s40, %s41
      %s43 = ssub.s32 %s22, %s31
      %s44 = sor.u32 %s42, %s43
      %p45 = scmp.eq.s32.totalorder %s44, 0
      %s47 = sadd.s32 %s46, 1
      %s48 = scalar_select %p45, %s46, %s47
      %p51 = pneg %p45
      %p52 = scmp.eq.s32.totalorder %s13, 7
      %p53 = por %p51, %p52
      %p54 = scmp.ne.s32.totalorder %s46, %s49
      %p55 = scmp.eq.s32.totalorder %s13, 0
      %p56 = por %p54, %p55
      %p57 = scmp.ne.s32.totalorder %s46, %s49
      %p58 = scmp.eq.s32.totalorder %s18, 7
      %p59 = por %p57, %p58
      %p60 = scmp.ne.s32.totalorder %s49, %s50
      %p61 = scmp.eq.s32.totalorder %s18, 0
      %p62 = por %p60, %p61
      %p63 = scmp.ne.s32.totalorder %s49, %s50
      %p64 = scmp.eq.s32.totalorder %s19, 7
      %p65 = por %p63, %p64
      %p67 = scmp.ne.s32.totalorder %s50, %s66
      %p68 = scmp.eq.s32.totalorder %s19, 0
      %p69 = por %p67, %p68
      %s70 = ssub.s32 %s20, %s39
      %s71 = ssub.s32 %s21, %s35
      %s72 = sor.u32 %s70, %s71
      %s73 = ssub.s32 %s22, %s31
      %s74 = sor.u32 %s72, %s73
      %p75 = scmp.eq.s32.totalorder %s74, 0
      %s77 = sadd.s32 %s76, 1
      %s78 = scalar_select %p75, %s76, %s77
      %p81 = pneg %p75
      %p82 = scmp.eq.s32.totalorder %s13, 7
      %p83 = por %p81, %p82
      %p84 = scmp.ne.s32.totalorder %s76, %s79
      %p85 = scmp.eq.s32.totalorder %s13, 0
      %p86 = por %p84, %p85
      %p87 = scmp.ne.s32.totalorder %s76, %s79
      %p88 = scmp.eq.s32.totalorder %s18, 7
      %p89 = por %p87, %p88
      %p90 = scmp.ne.s32.totalorder %s79, %s80
      %p91 = scmp.eq.s32.totalorder %s18, 0
      %p92 = por %p90, %p91
      %p93 = scmp.ne.s32.totalorder %s79, %s80
      %p94 = scmp.eq.s32.totalorder %s19, 7
      %p95 = por %p93, %p94
      %p97 = scmp.ne.s32.totalorder %s80, %s96
      %p98 = scmp.eq.s32.totalorder %s19, 0
      %p99 = por %p97, %p98
      %p100 = scmp.le.s32.totalorder 1, %s13
      %p101 = scmp.lt.s32.totalorder %s13, 9
      %p102 = pnand %p100, %p101
      %p103 = pneg %p102
      // Predicated region
      $region9: #{tpu_custom_call.1} parent=5 // pred_check
        _
      $region10: #{tpu_custom_call.1} parent=5 // pred_check_branch
        %105 = sbr.rel (%p102) target = $region12
      $region11: #{tpu_custom_call.1} parent=5 // pred_region
        %s106 = ssub.s32 %s13, 1
      $region12: #{tpu_custom_call.1} parent=5 // pred_fallthru
        _
      %p107 = scmp.lt.s32.totalorder %s13, 8
      // Predicated region
      $region13: #{tpu_custom_call.1} parent=5 // pred_check
        %p108 = pneg %p107
      $region14: #{tpu_custom_call.1} parent=5 // pred_check_branch
        %110 = sbr.rel (%p108) target = $region16
      $region15: #{tpu_custom_call.1} parent=5 // pred_region
        // Predicated region
        $region17: #{tpu_custom_call.1} parent=15 // pred_check
          %p111 = pneg %p56
        $region18: #{tpu_custom_call.1} parent=15 // pred_check_branch
          %113 = sbr.rel (%p111) target = $region20
        $region19: #{tpu_custom_call.1} parent=15 // pred_region
          %s114 = sand.u32 %s46, 1
          %s115 = scalar_lea.sflag [#allocation3], %s114
          %s116 = sand.u32 %s46, 1
          %s117 = smul.addr %s116, 16
          %s118 = scalar_lea.vmem [#allocation2], %s117
          %s119 = smul.u32 2, %s21
          %s121 = ssub.s32 256, 256
          %122 = vsyncadd %s115, %s121
          %s123 = sadd.s32 %s22, %s119
          %s124 = smul.addr %s20, 2
          %s125 = sadd.s32 %s123, %s124
          %s126 = smul.addr %s125, 128
          %s127 = scalar_lea.hbm %s0, %s126
          %s128 = sshll.u32 %s118, 4
          %s129 = int_to_ptr.vmem [resolvable:$true] %s128
          %134 = dma.hbm_to_vmem [thread:$0]  %s127, 256, %s129, %s115, 128, 128, 8
        $region20: #{tpu_custom_call.1} parent=15 // pred_fallthru
          _
      $region16: #{tpu_custom_call.1} parent=5 // pred_fallthru
        _
      %p135 = scmp.le.s32.totalorder 1, %s13
      %p136 = scmp.lt.s32.totalorder %s13, 9
      %p137 = pnand %p135, %p136
      %p138 = pneg %p137
      // Predicated region
      $region21: #{tpu_custom_call.1} parent=5 // pred_check
        _
      $region22: #{tpu_custom_call.1} parent=5 // pred_check_branch
        %140 = sbr.rel (%p137) target = $region24
      $region23: #{tpu_custom_call.1} parent=5 // pred_region
        %s141 = ssub.s32 %s13, 1
        %s142 = sand.u32 %s49, 1
        %s143 = scalar_lea.sflag [#allocation3], %s142
        %s144 = sand.u32 %s49, 1
        %s145 = smul.addr %s144, 16
        %s146 = scalar_lea.vmem [#allocation2], %s145
        // Predicated region
        $region25: #{tpu_custom_call.1} parent=23 // pred_check
          %p147 = pneg %p62
        $region26: #{tpu_custom_call.1} parent=23 // pred_check_branch
          %149 = sbr.rel (%p147) target = $region28
        $region27: #{tpu_custom_call.1} parent=23 // pred_region
          %150 = dma.done %s143, 256
        $region28: #{tpu_custom_call.1} parent=23 // pred_fallthru
          _
        %s151 = sand.u32 %s49, 1
        %s152 = scalar_lea.sflag [#allocation3], %s151
        %s153 = sand.u32 %s49, 1
        %s154 = smul.addr %s153, 16
        %s155 = scalar_lea.vmem [#allocation2], %s154
        %p156 = pneg %p62
        %p157 = pneg %p59
        %p158 = pneg %p92
        %p159 = pneg %p89
        %s160 = sand.u32 %s79, 1
        %s161 = scalar_lea.sflag [#allocation4], %s160
        %s162 = sand.u32 %s79, 1
        %s163 = smul.addr %s162, 16
        %s164 = scalar_lea.vmem [#allocation5], %s163
        %s165 = smul.u32 2, %s24
        %s166 = smul.u32 2, %s24
        %v167 = vld [vmem:[%s146] sm:$0xff]
        %v168 = vld [vmem:[%s146 + $0x8] sm:$0xff]
        %vm169 = vcmask 130048
        %170 = vst.msk [vmem:[%s164] sm:$0xff] %vm169, %v167
        %171 = vst.msk [vmem:[%s164 + $0x8] sm:$0xff] %vm169, %v168
        %s172 = sand.u32 %s79, 1
        %s173 = scalar_lea.sflag [#allocation4], %s172
        %s174 = sand.u32 %s79, 1
        %s175 = smul.addr %s174, 16
        %s176 = scalar_lea.vmem [#allocation5], %s175
        // Predicated region
        $region29: #{tpu_custom_call.1} parent=23 // pred_check
          %p177 = pneg %p89
        $region30: #{tpu_custom_call.1} parent=23 // pred_check_branch
          %179 = sbr.rel (%p177) target = $region32
        $region31: #{tpu_custom_call.1} parent=23 // pred_region
          %s180 = smul.u32 2, %s24
          %s182 = ssub.s32 256, 256
          %183 = vsyncadd %s173, %s182
          %s184 = sadd.s32 %s25, %s180
          %s185 = smul.addr %s23, 2
          %s186 = sadd.s32 %s184, %s185
          %s187 = smul.addr %s186, 128
          %s188 = scalar_lea.hbm %s1, %s187
          %s189 = sshll.u32 %s176, 4
          %s190 = int_to_ptr.vmem [resolvable:$true] %s189
          %195 = dma.vmem_to_hbm [thread:$0]  %s190, 256, %s188, %s173, 128, 128, 8
        $region32: #{tpu_custom_call.1} parent=23 // pred_fallthru
          _
      $region24: #{tpu_custom_call.1} parent=5 // pred_fallthru
        _
      %p196 = scmp.le.s32.totalorder 2, %s13
      // Predicated region
      $region33: #{tpu_custom_call.1} parent=5 // pred_check
        %p197 = pneg %p196
      $region34: #{tpu_custom_call.1} parent=5 // pred_check_branch
        %199 = sbr.rel (%p197) target = $region36
      $region35: #{tpu_custom_call.1} parent=5 // pred_region
        %s200 = ssub.s32 %s13, 2
        // Predicated region
        $region37: #{tpu_custom_call.1} parent=35 // pred_check
          %p201 = pneg %p95
        $region38: #{tpu_custom_call.1} parent=35 // pred_check_branch
          %203 = sbr.rel (%p201) target = $region40
        $region39: #{tpu_custom_call.1} parent=35 // pred_region
          %s204 = sand.u32 %s80, 1
          %s205 = scalar_lea.sflag [#allocation4], %s204
          %s206 = sand.u32 %s80, 1
          %s207 = smul.addr %s206, 16
          %s208 = scalar_lea.vmem [#allocation5], %s207
          %209 = dma.done %s205, 256
        $region40: #{tpu_custom_call.1} parent=35 // pred_fallthru
          _
      $region36: #{tpu_custom_call.1} parent=5 // pred_fallthru
        _
    $region6: #{tpu_custom_call.1} parent=1 // loop_footer
      %s17 = sadd.s32 1, %s13
    $region7: #{tpu_custom_call.1} parent=1 // loop_footer_branch
      %12 = sbr.rel target = $region3
    $region8: #{tpu_custom_call.1} parent=1 // loop_exit
      _
    %210 = vsyncpa [#allocation3], 1
    %s211 = scalar_lea.sflag [#allocation3], 1
    %212 = vsyncpa %s211, 1
    %213 = vsyncpa [#allocation4], 1
    %s214 = scalar_lea.sflag [#allocation4], 1
    %215 = vsyncpa %s214, 1

</llo_original>
